<compile_context>
chip_gen: v6e
topology: v6e:2x2x1
jax: 0.10.0
libtpu: 0.0.40
codegen_flags: <defaults>
</compile_context>

<pallas_src>
import functools

import jax
import jax.numpy as jnp
from jax.experimental import pallas as pl
from jax.experimental.pallas import tpu as pltpu


def _gem_kernel(s_ref, x_ref, o_ref, acc_ref, *, eps: float, hw: int,
                tile_hw: int, static_p):
    # s_ref  : SMEM (2,)                    (p, 1/p)
    # x_ref  : VMEM (TB, TC, TILE_HW)       input tile, H*W on lanes
    # o_ref  : VMEM (TB, TC, 1)             pooled output tile
    # acc_ref: VMEM (TB, TC, 1) f32         running sum over the H*W grid axis
    k = pl.program_id(2)

    @pl.when(k == 0)
    def _init():
        acc_ref[...] = jnp.zeros_like(acc_ref)

    x = jnp.maximum(x_ref[...].astype(jnp.float32), eps)   # clamp(min=eps) > 0
    if static_p is not None:
        xp = x                                              # x**p via VPU muls
        for _ in range(static_p - 1):
            xp = xp * x
    else:
        xp = jnp.exp(s_ref[0] * jnp.log(x))                 # x**p (EUP path)

    if hw % tile_hw != 0:                                   # ragged spatial tail
        hw_idx = k * tile_hw + jax.lax.broadcasted_iota(jnp.int32, xp.shape, 2)
        xp = jnp.where(hw_idx < hw, xp, 0.0)

    acc_ref[...] += jnp.sum(xp, axis=-1, keepdims=True)     # XLU lane reduce

    @pl.when(k == pl.num_programs(2) - 1)
    def _finalize():
        mean = acc_ref[...] * (1.0 / hw)                    # constant 1/HW
        o_ref[...] = jnp.exp(jnp.log(mean) * s_ref[1]).astype(o_ref.dtype)


def _vmem_capacity_bytes() -> int:
    try:
        cap = getattr(pltpu.get_tpu_info(), "vmem_capacity_bytes", None)
        if cap:
            return int(cap)
    except Exception:
        pass
    return 64 * 1024 * 1024          # conservative fallback (v7x-sized)


def _choose_tiles(B: int, C: int, HW: int, itemsize: int, target_bytes: int):
    """Pick (tile_b, tile_c, tile_hw) with input blocks <= target_bytes.

    Legality: tile_hw == HW or a multiple of 128 (<= HW);
              tile_c  == C  or a multiple of 8  (<= C);
              tile_b  unconstrained (first dim of 3-D blocks).
    """
    min_tc = C if C < 8 else 8
    if HW * itemsize * min_tc <= target_bytes:
        # Full spatial extent per block: single reduction step.
        tile_hw = HW
        cap_c = target_bytes // (HW * itemsize)
        tile_c = C if cap_c >= C else max(8, (cap_c // 8) * 8)
        tile_b = int(min(B, max(1, target_bytes // (tile_c * HW * itemsize))))
    else:
        # Spatial reduction tiled across the "arbitrary" grid axis.
        tile_c = min_tc
        tile_b = 1
        tile_hw = min(HW, target_bytes // (tile_c * itemsize)) // 128 * 128
        tile_hw = max(tile_hw, 128)

    # Keep >= 2 steps on the parallel axes so v7x's 2 TensorCores both get work.
    if pl.cdiv(B, tile_b) * pl.cdiv(C, tile_c) < 2:
        if tile_b > 1:
            tile_b = pl.cdiv(tile_b, 2)
        elif C >= 16 and tile_c == C:
            tile_c = ((pl.cdiv(C, 2) + 7) // 8) * 8
    return tile_b, tile_c, tile_hw


def gem_pallas(x: jax.Array, p, eps: float = 1e-6) -> jax.Array:
    """GeM pooling.  x: (B, C, H, W) NCHW.  Returns (B, C, 1, 1)."""
    B, C, H, W = x.shape
    HW = H * W
    x3 = x.reshape(B, C, HW)                         # free reshape (contiguous)

    p_scalar = jnp.asarray(p, jnp.float32).ravel()[0]
    scalars = jnp.stack([p_scalar, 1.0 / p_scalar])  # (p, 1/p) -> SMEM

    # Concrete small positive integer p (default p=3) -> VPU-only power.
    static_p = None
    try:
        pv = float(p_scalar)
        if pv > 0 and pv == round(pv) and pv <= 8:
            static_p = int(round(pv))
    except Exception:                                # traced p under jit
        static_p = None

    vmem_cap = _vmem_capacity_bytes()
    target_block = min(4 * 1024 * 1024, vmem_cap // 16)
    tile_b, tile_c, tile_hw = _choose_tiles(B, C, HW, x.dtype.itemsize,
                                            target_block)
    grid = (pl.cdiv(B, tile_b), pl.cdiv(C, tile_c), pl.cdiv(HW, tile_hw))

    n_elem = B * C * HW
    cost = pl.CostEstimate(
        flops=4 * n_elem + 4 * B * C,
        transcendentals=(0 if static_p is not None else 2 * n_elem) + 2 * B * C,
        bytes_accessed=n_elem * x.dtype.itemsize + B * C * x.dtype.itemsize + 8,
    )

    out = pl.pallas_call(
        functools.partial(_gem_kernel, eps=float(eps), hw=HW,
                          tile_hw=tile_hw, static_p=static_p),
        out_shape=jax.ShapeDtypeStruct((B, C, 1), x.dtype),
        grid=grid,
        in_specs=[
            pl.BlockSpec(memory_space=pltpu.SMEM),                    # (p, 1/p)
            pl.BlockSpec((tile_b, tile_c, tile_hw),
                         lambda b, c, k: (b, c, k)),
        ],
        out_specs=pl.BlockSpec((tile_b, tile_c, 1),
                               lambda b, c, k: (b, c, 0)),
        scratch_shapes=[pltpu.VMEM((tile_b, tile_c, 1), jnp.float32)],
        compiler_params=pltpu.CompilerParams(
            dimension_semantics=("parallel", "parallel", "arbitrary"),
            vmem_limit_bytes=int(min(vmem_cap * 3 // 4, 96 * 1024 * 1024)),
        ),
        cost_estimate=cost,
    )(scalars, x3)

    return out.reshape(B, C, 1, 1)


def gem_reference(x, p, eps=1e-6):
    """Pure-JAX reference mirroring the PyTorch module."""
    xp = jnp.power(jnp.maximum(x.astype(jnp.float32), eps), p)
    pooled = jnp.mean(xp, axis=(-2, -1), keepdims=True)
    return jnp.power(pooled, 1.0 / p).astype(x.dtype)


if __name__ == "__main__":
    key = jax.random.PRNGKey(0)
    B, C, H, W = 2, 4, 16, 16
    x = jax.random.normal(key, (B, C, H, W), dtype=jnp.float32)
    eps = 1e-6

    # Default GeM parameter (p = ones(1) * 3): exercises the integer-p VPU path.
    p_int = jnp.ones((1,), jnp.float32) * 3.0
    out_int = jax.block_until_ready(gem_pallas(x, p_int, eps=eps))
    ref_int = gem_reference(x, p_int[0], eps=eps)
    assert out_int.shape == (B, C, 1, 1), out_int.shape
    assert jnp.allclose(out_int, ref_int, rtol=1e-4, atol=1e-5), (
        f"max abs err (p=3) = {jnp.max(jnp.abs(out_int - ref_int))}")

    # Non-integer p: exercises the runtime exp(p*log(x)) EUP path.
    p_frac = jnp.full((1,), 3.5, jnp.float32)
    out_frac = jax.block_until_ready(gem_pallas(x, p_frac, eps=eps))
    ref_frac = gem_reference(x, p_frac[0], eps=eps)
    assert jnp.allclose(out_frac, ref_frac, rtol=1e-4, atol=1e-5), (
        f"max abs err (p=3.5) = {jnp.max(jnp.abs(out_frac - ref_frac))}")

    print("KERNEL_OK")
</pallas_src>

<mosaic_0001>
module attributes {stable_mosaic.version = 11 : i64} {
  func.func @_gem_kernel(%arg0: i32, %arg1: i32, %arg2: i32, %arg3: memref<2xf32, #tpu.memory_space<smem>>, %arg4: memref<1x4x256xf32, #tpu.memory_space<vmem>>, %arg5: memref<1x4x1xf32, #tpu.memory_space<vmem>>, %arg6: memref<1x4x1xf32, #tpu.memory_space<vmem>>) attributes {dimension_semantics = [#tpu.dimension_semantics<parallel>, #tpu.dimension_semantics<parallel>, #tpu.dimension_semantics<arbitrary>], iteration_bounds = array<i64: 2, 1, 1>, scalar_prefetch = 0 : i64, scratch_operands = 1 : i64, tpu.core_type = #tpu.core_type<tc>, window_params = [{transform_indices = @transform_0, window_bounds = array<i64: 2>}, {transform_indices = @transform_1, window_bounds = array<i64: 1, 4, 256>}, {transform_indices = @transform_2, window_bounds = array<i64: 1, 4, 1>}]} {
    %c0_i32 = arith.constant 0 : i32
    %0 = arith.cmpi eq, %arg2, %c0_i32 : i32
    %1 = arith.extui %0 : i1 to i32
    %c0_i32_0 = arith.constant 0 : i32
    %2 = arith.cmpi ne, %1, %c0_i32_0 : i32
    scf.if %2 {
      %cst_12 = arith.constant 0.000000e+00 : f32
      %16 = vector.broadcast %cst_12 : f32 to vector<1x4x1xf32>
      %c0_13 = arith.constant 0 : index
      %c0_14 = arith.constant 0 : index
      %c0_15 = arith.constant 0 : index
      %17 = vector.load %arg6[%c0_13, %c0_14, %c0_15] : memref<1x4x1xf32, #tpu.memory_space<vmem>>, vector<1x4x1xf32>
      tpu.vector_store %arg6[%c0_13, %c0_14, %c0_15], %16 {strides = array<i32>} : memref<1x4x1xf32, #tpu.memory_space<vmem>>, vector<1x4x1xf32>,
    } else {
    }
    %c0 = arith.constant 0 : index
    %c0_1 = arith.constant 0 : index
    %c0_2 = arith.constant 0 : index
    %3 = vector.load %arg4[%c0, %c0_1, %c0_2] : memref<1x4x256xf32, #tpu.memory_space<vmem>>, vector<1x4x256xf32>
    %cst = arith.constant 9.99999997E-7 : f32
    %4 = vector.broadcast %cst : f32 to vector<1x4x256xf32>
    %5 = arith.maximumf %3, %4 : vector<1x4x256xf32>
    %6 = arith.mulf %5, %5 : vector<1x4x256xf32>
    %7 = arith.mulf %6, %5 : vector<1x4x256xf32>
    %c0_3 = arith.constant 0 : index
    %c0_4 = arith.constant 0 : index
    %c0_5 = arith.constant 0 : index
    %8 = vector.load %arg6[%c0_3, %c0_4, %c0_5] : memref<1x4x1xf32, #tpu.memory_space<vmem>>, vector<1x4x1xf32>
    %cst_6 = arith.constant dense<0.000000e+00> : vector<1x4xf32>
    %9 = vector.multi_reduction <add>, %7, %cst_6 [2] : vector<1x4x256xf32> to vector<1x4xf32>
    %10 = vector.shape_cast %9 : vector<1x4xf32> to vector<1x4x1xf32>
    %11 = arith.addf %8, %10 : vector<1x4x1xf32>
    %c0_7 = arith.constant 0 : index
    %c0_8 = arith.constant 0 : index
    %c0_9 = arith.constant 0 : index
    %12 = vector.load %arg6[%c0_7, %c0_8, %c0_9] : memref<1x4x1xf32, #tpu.memory_space<vmem>>, vector<1x4x1xf32>
    tpu.vector_store %arg6[%c0_7, %c0_8, %c0_9], %11 {strides = array<i32>} : memref<1x4x1xf32, #tpu.memory_space<vmem>>, vector<1x4x1xf32>,
    %c0_i32_10 = arith.constant 0 : i32
    %13 = arith.cmpi eq, %arg2, %c0_i32_10 : i32
    %14 = arith.extui %13 : i1 to i32
    %c0_i32_11 = arith.constant 0 : i32
    %15 = arith.cmpi ne, %14, %c0_i32_11 : i32
    scf.if %15 {
      %c0_12 = arith.constant 0 : index
      %c0_13 = arith.constant 0 : index
      %c0_14 = arith.constant 0 : index
      %16 = vector.load %arg6[%c0_12, %c0_13, %c0_14] : memref<1x4x1xf32, #tpu.memory_space<vmem>>, vector<1x4x1xf32>
      %cst_15 = arith.constant 3.906250e-03 : f32
      %17 = vector.broadcast %cst_15 : f32 to vector<1x4x1xf32>
      %18 = arith.mulf %16, %17 : vector<1x4x1xf32>
      %19 = math.log %18 : vector<1x4x1xf32>
      %c1 = arith.constant 1 : index
      %20 = memref.load %arg3[%c1] : memref<2xf32, #tpu.memory_space<smem>>
      %21 = vector.broadcast %20 : f32 to vector<1x4x1xf32>
      %22 = arith.mulf %19, %21 : vector<1x4x1xf32>
      %23 = math.exp %22 : vector<1x4x1xf32>
      %c0_16 = arith.constant 0 : index
      %c0_17 = arith.constant 0 : index
      %c0_18 = arith.constant 0 : index
      %24 = vector.load %arg5[%c0_16, %c0_17, %c0_18] : memref<1x4x1xf32, #tpu.memory_space<vmem>>, vector<1x4x1xf32>
      tpu.vector_store %arg5[%c0_16, %c0_17, %c0_18], %23 {strides = array<i32>} : memref<1x4x1xf32, #tpu.memory_space<vmem>>, vector<1x4x1xf32>,
    } else {
    }
    return
  }
  func.func @transform_0(%arg0: i32, %arg1: i32, %arg2: i32) -> i32 {
    %c0_i32 = arith.constant 0 : i32
    %c0_i32_0 = arith.constant 0 : i32
    return %c0_i32 : i32
  }
  func.func @transform_1(%arg0: i32, %arg1: i32, %arg2: i32) -> (i32, i32, i32) {
    %c0_i32 = arith.constant 0 : i32
    return %arg0, %arg1, %arg2 : i32, i32, i32
  }
  func.func @transform_2(%arg0: i32, %arg1: i32, %arg2: i32) -> (i32, i32, i32) {
    %c0_i32 = arith.constant 0 : i32
    %c0_i32_0 = arith.constant 0 : i32
    return %arg0, %arg1, %c0_i32 : i32, i32, i32
  }
}

</mosaic_0001>

<llo_original>
// kernel: tpu_custom_call.1
$region0: #{tpu_custom_call.1}
  #allocation0 [shape = 'u32[]', space=smem, size = 0x4, offset = 0x4, fixed_abs, tag = 'smem constant byte address 0x4 - core index']
  #allocation1 [shape = 'u32[144,128]{1,0:T(1,128)}', space=vmem, size = 0x12000, scoped, tag = 'internal scratch']
  #allocation2 [shape = 'f32[1,4,1]{2,1,0:T(4,128)}', space=vmem, size = 0x800, scoped, tag = 'scratch operand']
  %s0 = inlined_call_operand.hbm [shape: f32[2], index: 0, kind: input, shape index: {}]
  %s1 = inlined_call_operand.hbm [shape: f32[2,4,256], index: 1, kind: input, shape index: {}]
  %s2 = inlined_call_operand.vmem [shape: f32[2,4,1], index: 2, kind: output, shape index: {}]
  %s3 = sld [smem:[#allocation0]]
  $region57: #{tpu_custom_call.1} parent=0
    _
  %s5 = ssub.s32 1, %s3
  %s6 = scalar_select 0, %s5, %s3
  $region1: #{tpu_custom_call.1} parent=0
    #allocation3 [shape = 'u8[512]{0}', space=smem, size = 0x200, scoped, tag = 'input window, operand 0, single buffered']
    #allocation4 [shape = 's32[2]{0}', space=sflag, size = 0x8, scoped, tag = 'scoped memory for tpu_custom_call.1']
    #allocation5 [shape = 's32[2]{0}', space=sflag, size = 0x8, scoped, tag = 'scoped memory for tpu_custom_call.1']
    #allocation6 [shape = 'u8[8192]{0}', space=vmem, size = 0x2000, scoped, tag = 'input window, operand 1']
    %7 = vsyncpa [#allocation5], 0
    %8 = vsyncpa [#allocation4], 0
    %s9 = scalar_lea.sflag [#allocation4], 1
    %10 = vsyncpa %s9, 0
    loop: start=0, step=1, limit=4
    $region2: #{tpu_custom_call.1} parent=1 // loop_pre_header
      _
    $region3: #{tpu_custom_call.1} parent=1 // loop_header
      %s12 = sphi 0, %s16
      %p13 = scmp.ge.s32.totalorder %s12, 4
      %s19 = sphi 0, %s38
      %s20 = sphi 0, %s34
      %s21 = sphi 0, %s30
      %s22 = sphi 0, %s19
      %s23 = sphi 0, %s20
      %s24 = sphi 0, %s21
      %s25 = sphi 0, %s22
      %s26 = sphi 0, %s23
      %s27 = sphi 0, %s24
      %s39 = sphi 0, %s39
      %s41 = sphi 0, %s39
      %s42 = sphi 0, %s41
      %s56 = sphi 0, %s42
      %s66 = sphi 0, %s68
      %s69 = sphi 0, %s66
      %s70 = sphi 0, %s69
      %s86 = sphi 0, %s70
      %s94 = sphi 0, %s96
      %s97 = sphi 0, %s94
      %s98 = sphi 0, %s97
      %s114 = sphi 0, %s98
    $region4: #{tpu_custom_call.1} parent=1 // loop_header_branch
      %15 = sbr.rel (%p13) target = $region8
    $region5: #{tpu_custom_call.1} parent=1 // loop_body
      %s17 = ssub.s32 %s12, 1
      %s18 = ssub.s32 %s12, 2
      %s28 = sadd.s32 1, %s21
      %p29 = scmp.ge.s32.totalorder %s28, 1
      %s30 = scalar_select %p29, 0, %s28
      %s31 = sadd.s32 1, %s20
      %s32 = scalar_select %p29, %s31, %s20
      %p33 = scmp.ge.s32.totalorder %s32, 1
      %s34 = scalar_select %p33, 0, %s32
      %s35 = sadd.s32 1, %s19
      %s36 = scalar_select %p33, %s35, %s19
      %p37 = scmp.ge.s32.totalorder %s36, 2
      %s38 = scalar_select %p37, 0, %s36
      %s40 = sadd.s32 %s39, 1
      %p43 = scmp.eq.s32.totalorder %s12, 1
      %p44 = scmp.ne.s32.totalorder %s39, %s41
      %p45 = scmp.eq.s32.totalorder %s12, 0
      %p46 = por %p44, %p45
      %p47 = scmp.ne.s32.totalorder %s39, %s41
      %p48 = scmp.eq.s32.totalorder %s17, 1
      %p49 = por %p47, %p48
      %p50 = scmp.ne.s32.totalorder %s41, %s42
      %p51 = scmp.eq.s32.totalorder %s17, 0
      %p52 = por %p50, %p51
      %p53 = scmp.ne.s32.totalorder %s41, %s42
      %p54 = scmp.eq.s32.totalorder %s18, 1
      %p55 = por %p53, %p54
      %p57 = scmp.ne.s32.totalorder %s42, %s56
      %p58 = scmp.eq.s32.totalorder %s18, 0
      %p59 = por %p57, %p58
      %s60 = ssub.s32 %s19, %s38
      %s61 = ssub.s32 %s20, %s34
      %s62 = sor.u32 %s60, %s61
      %s63 = ssub.s32 %s21, %s30
      %s64 = sor.u32 %s62, %s63
      %p65 = scmp.eq.s32.totalorder %s64, 0
      %s67 = sadd.s32 %s66, 1
      %s68 = scalar_select %p65, %s66, %s67
      %p71 = pneg %p65
      %p72 = scmp.eq.s32.totalorder %s12, 1
      %p73 = por %p71, %p72
      %p74 = scmp.ne.s32.totalorder %s66, %s69
      %p75 = scmp.eq.s32.totalorder %s12, 0
      %p76 = por %p74, %p75
      %p77 = scmp.ne.s32.totalorder %s66, %s69
      %p78 = scmp.eq.s32.totalorder %s17, 1
      %p79 = por %p77, %p78
      %p80 = scmp.ne.s32.totalorder %s69, %s70
      %p81 = scmp.eq.s32.totalorder %s17, 0
      %p82 = por %p80, %p81
      %p83 = scmp.ne.s32.totalorder %s69, %s70
      %p84 = scmp.eq.s32.totalorder %s18, 1
      %p85 = por %p83, %p84
      %p87 = scmp.ne.s32.totalorder %s70, %s86
      %p88 = scmp.eq.s32.totalorder %s18, 0
      %p89 = por %p87, %p88
      %s90 = ssub.s32 %s19, %s38
      %s91 = ssub.s32 %s20, %s34
      %s92 = sor.u32 %s90, %s91
      %p93 = scmp.eq.s32.totalorder %s92, 0
      %s95 = sadd.s32 %s94, 1
      %s96 = scalar_select %p93, %s94, %s95
      %p99 = pneg %p93
      %p100 = scmp.eq.s32.totalorder %s12, 1
      %p101 = por %p99, %p100
      %p102 = scmp.ne.s32.totalorder %s94, %s97
      %p103 = scmp.eq.s32.totalorder %s12, 0
      %p104 = por %p102, %p103
      %p105 = scmp.ne.s32.totalorder %s94, %s97
      %p106 = scmp.eq.s32.totalorder %s17, 1
      %p107 = por %p105, %p106
      %p108 = scmp.ne.s32.totalorder %s97, %s98
      %p109 = scmp.eq.s32.totalorder %s17, 0
      %p110 = por %p108, %p109
      %p111 = scmp.ne.s32.totalorder %s97, %s98
      %p112 = scmp.eq.s32.totalorder %s18, 1
      %p113 = por %p111, %p112
      %p115 = scmp.ne.s32.totalorder %s98, %s114
      %p116 = scmp.eq.s32.totalorder %s18, 0
      %p117 = por %p115, %p116
      %p118 = scmp.le.s32.totalorder 1, %s12
      %p119 = scmp.lt.s32.totalorder %s12, 3
      %p120 = pnand %p118, %p119
      %p121 = pneg %p120
      // Predicated region
      $region9: #{tpu_custom_call.1} parent=5 // pred_check
        _
      $region10: #{tpu_custom_call.1} parent=5 // pred_check_branch
        %123 = sbr.rel (%p120) target = $region12
      $region11: #{tpu_custom_call.1} parent=5 // pred_region
        %s124 = ssub.s32 %s12, 1
        // Predicated region
        $region13: #{tpu_custom_call.1} parent=11 // pred_check
          %p125 = pneg %p52
        $region14: #{tpu_custom_call.1} parent=11 // pred_check_branch
          %127 = sbr.rel (%p125) target = $region16
        $region15: #{tpu_custom_call.1} parent=11 // pred_region
          %s129 = ssub.s32 16, 16
          %130 = vsyncadd [#allocation5], %s129
          %133 = dma.hbm_to_smem %s0, 16, [#allocation3], [#allocation5]
        $region16: #{tpu_custom_call.1} parent=11 // pred_fallthru
          _
      $region12: #{tpu_custom_call.1} parent=5 // pred_fallthru
        _
      %p134 = scmp.lt.s32.totalorder %s12, 2
      // Predicated region
      $region17: #{tpu_custom_call.1} parent=5 // pred_check
        %p135 = pneg %p134
      $region18: #{tpu_custom_call.1} parent=5 // pred_check_branch
        %137 = sbr.rel (%p135) target = $region20
      $region19: #{tpu_custom_call.1} parent=5 // pred_region
        // Predicated region
        $region21: #{tpu_custom_call.1} parent=19 // pred_check
          %p138 = pneg %p76
        $region22: #{tpu_custom_call.1} parent=19 // pred_check_branch
          %140 = sbr.rel (%p138) target = $region24
        $region23: #{tpu_custom_call.1} parent=19 // pred_region
          %s141 = sand.u32 %s66, 1
          %s142 = scalar_lea.sflag [#allocation4], %s141
          %s143 = sand.u32 %s66, 1
          %s144 = smul.addr %s143, 8
          %s145 = scalar_lea.vmem [#allocation6], %s144
          %s146 = smul.u32 2, %s21
          %s148 = ssub.s32 128, 128
          %149 = vsyncadd %s142, %s148
          %s150 = smul.addr %s20, 2
          %s151 = sadd.s32 %s146, %s150
          %s152 = smul.addr %s19, 2
          %s153 = sadd.s32 %s151, %s152
          %s154 = smul.addr %s153, 64
          %s155 = scalar_lea.hbm %s1, %s154
          %s157 = sshll.u32 %s145, 4
          %s158 = int_to_ptr.vmem [resolvable:$true] %s157
          %160 = dma.hbm_to_vmem [thread:$0]  %s155, 128, %s158, %s142
        $region24: #{tpu_custom_call.1} parent=19 // pred_fallthru
          _
      $region20: #{tpu_custom_call.1} parent=5 // pred_fallthru
        _
      %p161 = scmp.le.s32.totalorder 1, %s12
      %p162 = scmp.lt.s32.totalorder %s12, 3
      %p163 = pnand %p161, %p162
      %p164 = pneg %p163
      // Predicated region
      $region25: #{tpu_custom_call.1} parent=5 // pred_check
        _
      $region26: #{tpu_custom_call.1} parent=5 // pred_check_branch
        %166 = sbr.rel (%p163) target = $region28
      $region27: #{tpu_custom_call.1} parent=5 // pred_region
        %s167 = ssub.s32 %s12, 1
        // Predicated region
        $region29: #{tpu_custom_call.1} parent=27 // pred_check
          %p168 = pneg %p52
        $region30: #{tpu_custom_call.1} parent=27 // pred_check_branch
          %170 = sbr.rel (%p168) target = $region32
        $region31: #{tpu_custom_call.1} parent=27 // pred_region
          %171 = dma.done [#allocation5], 16
        $region32: #{tpu_custom_call.1} parent=27 // pred_fallthru
          _
        %s172 = sand.u32 %s69, 1
        %s173 = scalar_lea.sflag [#allocation4], %s172
        %s174 = sand.u32 %s69, 1
        %s175 = smul.addr %s174, 8
        %s176 = scalar_lea.vmem [#allocation6], %s175
        // Predicated region
        $region33: #{tpu_custom_call.1} parent=27 // pred_check
          %p177 = pneg %p82
        $region34: #{tpu_custom_call.1} parent=27 // pred_check_branch
          %179 = sbr.rel (%p177) target = $region36
        $region35: #{tpu_custom_call.1} parent=27 // pred_region
          %180 = dma.done %s173, 128
        $region36: #{tpu_custom_call.1} parent=27 // pred_fallthru
          _
        %181 = sfence
        %p182 = pneg %p52
        %p183 = pneg %p49
        %s184 = sand.u32 %s69, 1
        %s185 = scalar_lea.sflag [#allocation4], %s184
        %s186 = sand.u32 %s69, 1
        %s187 = smul.addr %s186, 8
        %s188 = scalar_lea.vmem [#allocation6], %s187
        %p189 = pneg %p82
        %p190 = pneg %p79
        %p191 = pneg %p110
        %p192 = pneg %p107
        %p193 = scmp.lt.s32.totalorder %s22, 1
        %s194 = scalar_select %p193, %s22, 1
        %p195 = scmp.lt.s32.totalorder %s23, 0
        %s196 = scalar_select %p195, %s23, 0
        %s197 = sadd.s32 %s196, %s194
        %s198 = smul.addr %s197, 4
        %s199 = scalar_lea.vmem %s2, %s198
        %s200 = smul.u32 2, %s24
        %p201 = scmp.lt.s32.totalorder %s22, 1
        %s202 = scalar_select %p201, %s22, 1
        %p203 = scmp.lt.s32.totalorder %s23, 0
        %s204 = scalar_select %p203, %s23, 0
        %s205 = sadd.s32 %s204, %s202
        %s206 = smul.addr %s205, 4
        %s207 = scalar_lea.vmem %s2, %s206
        %p208 = scmp.eq.s32.totalorder %s24, 0
        // Predicated region
        $region37: #{tpu_custom_call.1} parent=27 // pred_check
          %p209 = pneg %p208
        $region38: #{tpu_custom_call.1} parent=27 // pred_check_branch
          %211 = sbr.rel (%p209) target = $region40
        $region39: #{tpu_custom_call.1} parent=27 // pred_region
          %vm212 = vcmask 3072
          %213 = vst.msk [vmem:[#allocation2] sm:$0xf] %vm212, 0.0
        $region40: #{tpu_custom_call.1} parent=27 // pred_fallthru
          _
        %v214 = vld [vmem:[%s176] sm:$0xff]
        %v215 = vmax.f32 %v214, 1e-06
        %v216 = vmul.f32 %v215, %v215
        %v217 = vmul.f32 %v216, %v215
        %v218 = vld [vmem:[#allocation2] sm:$0xf]
        %v220 = vcombine.high %v217, %v217
        %vm222 = vcmask 1043456
        %v223 = vsel %vm222, %v217, 0.0
        %v224 = vsel %vm222, %v220, 0.0
        %v225 = vadd.f32 %v223, %v224
        %226 = vadd.xlane.f32.xlu0 %v225
        %v227 = vpop.xlane.xlu0 %226
        %v228 = vadd.f32 %v218, %v227
        %vm229 = vcmask 3072
        %230 = vst.msk [vmem:[#allocation2] sm:$0xf] %vm229, %v228
        // Predicated region
        $region41: #{tpu_custom_call.1} parent=27 // pred_check
          %p231 = pneg %p208
        $region42: #{tpu_custom_call.1} parent=27 // pred_check_branch
          %233 = sbr.rel (%p231) target = $region44
        $region43: #{tpu_custom_call.1} parent=27 // pred_region
          %v234 = vld [vmem:[#allocation2] sm:$0xf]
          %v235 = vmul.f32 %v234, 0.00390625
          %v236 = vlog2.pop %v235
          %v237 = vmul.f32 %v236, 0.6931472
          %s238 = sld [smem:[#allocation3 + $0x1]]
          %v239 = vstv %s238
          %v240 = vmul.f32 %v237, %v239
          %v241 = vmul.f32 %v240, 1.442695
          %v242 = vpow.pop %v241
          %243 = vst.msk [vmem:[%s207] sm:$0xf] %vm229, %v242
        $region44: #{tpu_custom_call.1} parent=27 // pred_fallthru
          _
        %p244 = scmp.lt.s32.totalorder %s22, 1
        %s245 = scalar_select %p244, %s22, 1
        %p246 = scmp.lt.s32.totalorder %s23, 0
        %s247 = scalar_select %p246, %s23, 0
        %s248 = sadd.s32 %s247, %s245
        %s249 = smul.addr %s248, 4
        %s250 = scalar_lea.vmem %s2, %s249
        // Predicated region
        $region45: #{tpu_custom_call.1} parent=27 // pred_check
          %p251 = pneg %p107
        $region46: #{tpu_custom_call.1} parent=27 // pred_check_branch
          %253 = sbr.rel (%p251) target = $region48
        $region47: #{tpu_custom_call.1} parent=27 // pred_region
          _
        $region48: #{tpu_custom_call.1} parent=27 // pred_fallthru
          _
      $region28: #{tpu_custom_call.1} parent=5 // pred_fallthru
        _
      %p254 = scmp.le.s32.totalorder 2, %s12
      // Predicated region
      $region49: #{tpu_custom_call.1} parent=5 // pred_check
        %p255 = pneg %p254
      $region50: #{tpu_custom_call.1} parent=5 // pred_check_branch
        %257 = sbr.rel (%p255) target = $region52
      $region51: #{tpu_custom_call.1} parent=5 // pred_region
        %s258 = ssub.s32 %s12, 2
        // Predicated region
        $region53: #{tpu_custom_call.1} parent=51 // pred_check
          %p259 = pneg %p113
        $region54: #{tpu_custom_call.1} parent=51 // pred_check_branch
          %261 = sbr.rel (%p259) target = $region56
        $region55: #{tpu_custom_call.1} parent=51 // pred_region
          %p262 = scmp.lt.s32.totalorder %s25, 1
          %s263 = scalar_select %p262, %s25, 1
          %p264 = scmp.lt.s32.totalorder %s26, 0
          %s265 = scalar_select %p264, %s26, 0
          %s266 = sadd.s32 %s265, %s263
          %s267 = smul.addr %s266, 4
          %s268 = scalar_lea.vmem %s2, %s267
        $region56: #{tpu_custom_call.1} parent=51 // pred_fallthru
          _
      $region52: #{tpu_custom_call.1} parent=5 // pred_fallthru
        _
    $region6: #{tpu_custom_call.1} parent=1 // loop_footer
      %s16 = sadd.s32 1, %s12
    $region7: #{tpu_custom_call.1} parent=1 // loop_footer_branch
      %11 = sbr.rel target = $region3
    $region8: #{tpu_custom_call.1} parent=1 // loop_exit
      _
    %269 = vsyncpa [#allocation4], 1
    %s270 = scalar_lea.sflag [#allocation4], 1
    %271 = vsyncpa %s270, 1
    %272 = vsyncpa [#allocation5], 1
    %s273 = scalar_lea.sflag [#allocation5], 1
    %274 = vsyncpa %s273, 1

</llo_original>
